<compile_context>
chip_gen: v6e
topology: v6e:2x2x1
jax: 0.10.0
libtpu: 0.0.40
codegen_flags: <defaults>
</compile_context>

<pallas_src>
import functools

import jax
import jax.numpy as jnp
from jax.experimental import pallas as pl
from jax.experimental.pallas import tpu as pltpu

NEURAL_NUMS = 50
EPS = 1e-5
LANE = 128


def _ceil_to(n, m):
    return ((n + m - 1) // m) * m


def _bn_stats(h, inv_n):
    """One-pass batch mean and rsqrt(var+eps) (biased variance).

    NOTE: E[x^2] - E[x]^2 can cancel catastrophically when |mean| >> std;
    fine in f32 for typical activation magnitudes but a (documented)
    numerical divergence from the two-pass PyTorch formulation.
    """
    s1 = jnp.sum(h, axis=0, keepdims=True)
    s2 = jnp.sum(h * h, axis=0, keepdims=True)
    mu = s1 * inv_n
    var = s2 * inv_n - mu * mu
    return mu, jax.lax.rsqrt(var + EPS)


def actor_kernel(x_ref, w1_ref, w2_ref, w3_ref, p_ref, out_ref, *, fold_input_bn):
    # x is passed unpadded along the batch dim -> batch statistics are exact.
    inv_b = 1.0 / x_ref.shape[0]
    x = x_ref[...]                                   # (B, F) f32

    # Packed parameter block (8, PW): load each full (unmasked) row once.
    # Padded lanes are exact zeros (incl. gamma) so they stay 0 through
    # BN+ReLU and contribute nothing to the matmuls.
    b1 = p_ref[0:1, :]
    b2 = p_ref[1:2, :]
    b3 = p_ref[2:3, :]
    g_l = p_ref[3:4, :]
    be_l = p_ref[4:5, :]

    # ---- input BatchNorm (affine already folded into w1/b1 by the wrapper) ----
    mu0, r0 = _bn_stats(x, inv_b)                    # (1, F)

    if fold_input_bn:
        # h1 = ((x - mu0) * r0) @ w1 + b1
        #    = x @ (diag(r0) @ w1) + (b1 - mu0 @ (diag(r0) @ w1))
        # diag(r0) built via iota mask; the extra (F,F)@(F,PW) matmul is
        # negligible next to the saved (B, F) elementwise passes once B >> F.
        f = x.shape[1]
        eye = (jax.lax.broadcasted_iota(jnp.int32, (f, f), 0) ==
               jax.lax.broadcasted_iota(jnp.int32, (f, f), 1)).astype(jnp.float32)
        w1s = jnp.dot(eye * r0, w1_ref[...].astype(jnp.float32),
                      preferred_element_type=jnp.float32)     # (F, PW) f32
        bias1 = b1 - jnp.dot(mu0, w1s, preferred_element_type=jnp.float32)
        h1 = jnp.dot(x, w1s, preferred_element_type=jnp.float32) + bias1
    else:
        x0 = (x - mu0) * r0
        h1 = (jnp.dot(x0, w1_ref[...].astype(jnp.float32),
                      preferred_element_type=jnp.float32) + b1)

    # ---- fc1 result -> shared layer BN -> ReLU ----
    mu1, r1 = _bn_stats(h1, inv_b)
    sc1 = g_l * r1
    a1 = jnp.maximum(h1 * sc1 + (be_l - mu1 * sc1), 0.0)

    # ---- fc2 -> shared layer BN -> ReLU ----
    h2 = (jnp.dot(a1, w2_ref[...].astype(jnp.float32),
                  preferred_element_type=jnp.float32) + b2)
    mu2, r2 = _bn_stats(h2, inv_b)
    sc2 = g_l * r2
    a2 = jnp.maximum(h2 * sc2 + (be_l - mu2 * sc2), 0.0)

    # ---- output layer (lane-dense store; real lanes sliced in wrapper) ----
    out_ref[...] = (jnp.dot(a2, w3_ref[...].astype(jnp.float32),
                            preferred_element_type=jnp.float32) + b3)


def prepare_params(params, weight_dtype=jnp.bfloat16):
    """One-time fold / pad / pack of Actor parameters.

    Call once per parameter update; the result feeds actor_forward so the
    per-call path does no parameter preparation.
    """
    F, H = params["w1"].shape
    A = params["w3"].shape[1]
    Hp = _ceil_to(H, LANE)
    Ap = _ceil_to(A, LANE)
    PW = max(Hp, Ap)          # one padded lane width for hidden AND action dims

    # Fold input-BN affine into fc1: w1' = diag(g_in)@w1, b1' = b1 + be_in@w1.
    w1f = params["g_in"].T * params["w1"]
    b1f = params["b1"] + params["be_in"] @ params["w1"]

    def padw(a, rows, cols):
        return jnp.pad(a, ((0, rows - a.shape[0]), (0, cols - a.shape[1])))

    def row(v):
        # Padded lanes MUST be zero (incl. gamma) -> they stay exactly zero
        # through BN+ReLU and feed zeros into subsequent matmuls.
        return jnp.pad(v, ((0, 0), (0, PW - v.shape[1])))

    packed = jnp.concatenate(
        [row(b1f), row(params["b2"]), row(params["b3"]),
         row(params["g_l"]), row(params["be_l"]),
         jnp.zeros((3, PW), jnp.float32)],
        axis=0)                                       # (8, PW) f32

    return dict(
        w1=padw(w1f, F, PW).astype(weight_dtype),     # (F,  PW) feature dim unpadded
        w2=padw(params["w2"], PW, PW).astype(weight_dtype),
        w3=padw(params["w3"], PW, PW).astype(weight_dtype),
        packed=packed,
        n_action=A,                                   # python int (static)
    )


@functools.partial(jax.jit, static_argnames=("n_action", "fold_input_bn"))
def _actor_forward_impl(x, w1, w2, w3, packed, *, n_action, fold_input_bn):
    B = x.shape[0]
    PW = w2.shape[1]
    vmem = pl.BlockSpec(memory_space=pltpu.MemorySpace.VMEM)
    out_padded = pl.pallas_call(
        functools.partial(actor_kernel, fold_input_bn=fold_input_bn),
        out_shape=jax.ShapeDtypeStruct((B, PW), jnp.float32),
        in_specs=[vmem] * 5,
        out_specs=vmem,
        compiler_params=pltpu.CompilerParams(
            # Explicit scoped-VMEM budget (v5e default is only 16 MiB; v7x
            # physical is 64 MiB).  Single-block design is fine for RL-sized
            # batches; see TODO above for chunking beyond that.
            vmem_limit_bytes=32 * 1024 * 1024),
    )(x, w1, w2, w3, packed)
    return out_padded[:, :n_action]


def actor_forward(x, prepped, fold_input_bn=None):
    """x: (B, feature_numbers) f32 -> (B, action_numbers) f32."""
    if fold_input_bn is None:
        # Folding the input-BN normalization into w1 inside the kernel wins
        # once B exceeds the (F, PW) weight it rescales (~one lane width).
        fold_input_bn = x.shape[0] > LANE
    return _actor_forward_impl(
        x, prepped["w1"], prepped["w2"], prepped["w3"], prepped["packed"],
        n_action=prepped["n_action"], fold_input_bn=bool(fold_input_bn))


def init_params(key, feature_numbers, action_numbers):
    """Deterministic synthetic init (PyTorch-Linear-style uniform bounds)."""
    ks = jax.random.split(key, 6)

    def lin(kw, kb, fan_in, fan_out):
        bound = 1.0 / jnp.sqrt(fan_in)
        # stored as (in, out) == transpose of PyTorch's (out, in) weight
        w = jax.random.uniform(kw, (fan_in, fan_out), jnp.float32, -bound, bound)
        b = jax.random.uniform(kb, (1, fan_out), jnp.float32, -bound, bound)
        return w, b

    w1, b1 = lin(ks[0], ks[1], feature_numbers, NEURAL_NUMS)
    w2, b2 = lin(ks[2], ks[3], NEURAL_NUMS, NEURAL_NUMS)
    w3, b3 = lin(ks[4], ks[5], NEURAL_NUMS, action_numbers)
    return dict(
        w1=w1, b1=b1, w2=w2, b2=b2, w3=w3, b3=b3,
        # BatchNorm affine params: gamma=1, beta=0 (PyTorch default init)
        g_in=jnp.ones((1, feature_numbers), jnp.float32),
        be_in=jnp.zeros((1, feature_numbers), jnp.float32),
        g_l=jnp.ones((1, NEURAL_NUMS), jnp.float32),
        be_l=jnp.zeros((1, NEURAL_NUMS), jnp.float32),
    )


def _bn_ref(h, gamma, beta):
    mu = jnp.mean(h, axis=0, keepdims=True)
    var = jnp.mean((h - mu) * (h - mu), axis=0, keepdims=True)
    return (h - mu) * jax.lax.rsqrt(var + EPS) * gamma + beta


def actor_reference(x, p):
    """Pure-JAX reference of the PyTorch forward (training-mode BN)."""
    x0 = _bn_ref(x, p["g_in"], p["be_in"])
    h1 = x0 @ p["w1"] + p["b1"]
    a1 = jnp.maximum(_bn_ref(h1, p["g_l"], p["be_l"]), 0.0)
    h2 = a1 @ p["w2"] + p["b2"]
    a2 = jnp.maximum(_bn_ref(h2, p["g_l"], p["be_l"]), 0.0)
    return a2 @ p["w3"] + p["b3"]


if __name__ == "__main__":
    feature_numbers = 16
    action_numbers = 4
    batch = 8

    key = jax.random.PRNGKey(0)
    k_x, k_p = jax.random.split(key)
    x = jax.random.normal(k_x, (batch, feature_numbers), jnp.float32)
    params = init_params(k_p, feature_numbers, action_numbers)
    ref = actor_reference(x, params)

    # f32 weights: tight tolerance vs. the pure-JAX reference.
    prepped_f32 = prepare_params(params, weight_dtype=jnp.float32)
    out = jax.block_until_ready(actor_forward(x, prepped_f32))
    assert out.shape == (batch, action_numbers)
    assert jnp.allclose(out, ref, atol=2e-4, rtol=2e-4)

    # In-kernel input-BN fold path (auto-enabled only for B > 128), forced here.
    out_fold = jax.block_until_ready(
        actor_forward(x, prepped_f32, fold_input_bn=True))
    assert jnp.allclose(out_fold, ref, atol=2e-4, rtol=2e-4)

    # Default bf16 weights: half the weight DMA; looser tolerance for the
    # ~1e-3 relative error from bf16 weight rounding through three layers.
    prepped = prepare_params(params)
    out_bf16 = jax.block_until_ready(actor_forward(x, prepped))
    assert jnp.allclose(out_bf16, ref, atol=3e-2, rtol=3e-2)

    print("KERNEL_OK")
</pallas_src>

<mosaic_0001>
module attributes {stable_mosaic.version = 11 : i64} {
  func.func @actor_kernel(%arg0: memref<8x16xf32, #tpu.memory_space<vmem>>, %arg1: memref<16x128xf32, #tpu.memory_space<vmem>>, %arg2: memref<128x128xf32, #tpu.memory_space<vmem>>, %arg3: memref<128x128xf32, #tpu.memory_space<vmem>>, %arg4: memref<8x128xf32, #tpu.memory_space<vmem>>, %arg5: memref<8x128xf32, #tpu.memory_space<vmem>>) attributes {dimension_semantics = [], scalar_prefetch = 0 : i64, scratch_operands = 0 : i64, tpu.core_type = #tpu.core_type<tc>} {
    %c0 = arith.constant 0 : index
    %c0_0 = arith.constant 0 : index
    %0 = vector.load %arg0[%c0, %c0_0] : memref<8x16xf32, #tpu.memory_space<vmem>>, vector<8x16xf32>
    %c0_1 = arith.constant 0 : index
    %c0_2 = arith.constant 0 : index
    %1 = vector.load %arg4[%c0_1, %c0_2] : memref<8x128xf32, #tpu.memory_space<vmem>>, vector<1x128xf32>
    %c1 = arith.constant 1 : index
    %c0_3 = arith.constant 0 : index
    %2 = vector.load %arg4[%c1, %c0_3] : memref<8x128xf32, #tpu.memory_space<vmem>>, vector<1x128xf32>
    %c2 = arith.constant 2 : index
    %c0_4 = arith.constant 0 : index
    %3 = vector.load %arg4[%c2, %c0_4] : memref<8x128xf32, #tpu.memory_space<vmem>>, vector<1x128xf32>
    %c3 = arith.constant 3 : index
    %c0_5 = arith.constant 0 : index
    %4 = vector.load %arg4[%c3, %c0_5] : memref<8x128xf32, #tpu.memory_space<vmem>>, vector<1x128xf32>
    %c4 = arith.constant 4 : index
    %c0_6 = arith.constant 0 : index
    %5 = vector.load %arg4[%c4, %c0_6] : memref<8x128xf32, #tpu.memory_space<vmem>>, vector<1x128xf32>
    %cst = arith.constant dense<0.000000e+00> : vector<16xf32>
    %6 = vector.multi_reduction <add>, %0, %cst [0] : vector<8x16xf32> to vector<16xf32>
    %7 = vector.shape_cast %6 : vector<16xf32> to vector<1x16xf32>
    %8 = arith.mulf %0, %0 : vector<8x16xf32>
    %cst_7 = arith.constant dense<0.000000e+00> : vector<16xf32>
    %9 = vector.multi_reduction <add>, %8, %cst_7 [0] : vector<8x16xf32> to vector<16xf32>
    %10 = vector.shape_cast %9 : vector<16xf32> to vector<1x16xf32>
    %cst_8 = arith.constant 1.250000e-01 : f32
    %11 = vector.broadcast %cst_8 : f32 to vector<1x16xf32>
    %12 = arith.mulf %7, %11 : vector<1x16xf32>
    %cst_9 = arith.constant 1.250000e-01 : f32
    %13 = vector.broadcast %cst_9 : f32 to vector<1x16xf32>
    %14 = arith.mulf %10, %13 : vector<1x16xf32>
    %15 = arith.mulf %12, %12 : vector<1x16xf32>
    %16 = arith.subf %14, %15 : vector<1x16xf32>
    %cst_10 = arith.constant 9.99999974E-6 : f32
    %17 = vector.broadcast %cst_10 : f32 to vector<1x16xf32>
    %18 = arith.addf %16, %17 : vector<1x16xf32>
    %19 = math.rsqrt %18 : vector<1x16xf32>
    %20 = vector.broadcast %12 : vector<1x16xf32> to vector<8x16xf32>
    %21 = arith.subf %0, %20 : vector<8x16xf32>
    %22 = vector.broadcast %19 : vector<1x16xf32> to vector<8x16xf32>
    %23 = arith.mulf %21, %22 : vector<8x16xf32>
    %c0_11 = arith.constant 0 : index
    %c0_12 = arith.constant 0 : index
    %24 = vector.load %arg1[%c0_11, %c0_12] : memref<16x128xf32, #tpu.memory_space<vmem>>, vector<16x128xf32>
    %cst_13 = arith.constant dense<0.000000e+00> : vector<8x128xf32>
    %25 = tpu.matmul %23, %24, %cst_13 {dimension_numbers = #tpu.dot_dimension_numbers<[1], [0], [0], [1], [0, 0, 1, 1], [], []>} : vector<8x16xf32>, vector<16x128xf32>, vector<8x128xf32> -> vector<8x128xf32>
    %26 = vector.broadcast %1 : vector<1x128xf32> to vector<8x128xf32>
    %27 = arith.addf %25, %26 : vector<8x128xf32>
    %cst_14 = arith.constant dense<0.000000e+00> : vector<128xf32>
    %28 = vector.multi_reduction <add>, %27, %cst_14 [0] : vector<8x128xf32> to vector<128xf32>
    %29 = vector.shape_cast %28 : vector<128xf32> to vector<1x128xf32>
    %30 = arith.mulf %27, %27 : vector<8x128xf32>
    %cst_15 = arith.constant dense<0.000000e+00> : vector<128xf32>
    %31 = vector.multi_reduction <add>, %30, %cst_15 [0] : vector<8x128xf32> to vector<128xf32>
    %32 = vector.shape_cast %31 : vector<128xf32> to vector<1x128xf32>
    %cst_16 = arith.constant 1.250000e-01 : f32
    %33 = vector.broadcast %cst_16 : f32 to vector<1x128xf32>
    %34 = arith.mulf %29, %33 : vector<1x128xf32>
    %cst_17 = arith.constant 1.250000e-01 : f32
    %35 = vector.broadcast %cst_17 : f32 to vector<1x128xf32>
    %36 = arith.mulf %32, %35 : vector<1x128xf32>
    %37 = arith.mulf %34, %34 : vector<1x128xf32>
    %38 = arith.subf %36, %37 : vector<1x128xf32>
    %cst_18 = arith.constant 9.99999974E-6 : f32
    %39 = vector.broadcast %cst_18 : f32 to vector<1x128xf32>
    %40 = arith.addf %38, %39 : vector<1x128xf32>
    %41 = math.rsqrt %40 : vector<1x128xf32>
    %42 = arith.mulf %4, %41 : vector<1x128xf32>
    %43 = vector.broadcast %42 : vector<1x128xf32> to vector<8x128xf32>
    %44 = arith.mulf %27, %43 : vector<8x128xf32>
    %45 = arith.mulf %34, %42 : vector<1x128xf32>
    %46 = arith.subf %5, %45 : vector<1x128xf32>
    %47 = vector.broadcast %46 : vector<1x128xf32> to vector<8x128xf32>
    %48 = arith.addf %44, %47 : vector<8x128xf32>
    %cst_19 = arith.constant 0.000000e+00 : f32
    %49 = vector.broadcast %cst_19 : f32 to vector<8x128xf32>
    %50 = arith.maximumf %48, %49 : vector<8x128xf32>
    %c0_20 = arith.constant 0 : index
    %c0_21 = arith.constant 0 : index
    %51 = vector.load %arg2[%c0_20, %c0_21] : memref<128x128xf32, #tpu.memory_space<vmem>>, vector<128x128xf32>
    %cst_22 = arith.constant dense<0.000000e+00> : vector<8x128xf32>
    %52 = tpu.matmul %50, %51, %cst_22 {dimension_numbers = #tpu.dot_dimension_numbers<[1], [0], [0], [1], [0, 0, 1, 1], [], []>} : vector<8x128xf32>, vector<128x128xf32>, vector<8x128xf32> -> vector<8x128xf32>
    %53 = vector.broadcast %2 : vector<1x128xf32> to vector<8x128xf32>
    %54 = arith.addf %52, %53 : vector<8x128xf32>
    %cst_23 = arith.constant dense<0.000000e+00> : vector<128xf32>
    %55 = vector.multi_reduction <add>, %54, %cst_23 [0] : vector<8x128xf32> to vector<128xf32>
    %56 = vector.shape_cast %55 : vector<128xf32> to vector<1x128xf32>
    %57 = arith.mulf %54, %54 : vector<8x128xf32>
    %cst_24 = arith.constant dense<0.000000e+00> : vector<128xf32>
    %58 = vector.multi_reduction <add>, %57, %cst_24 [0] : vector<8x128xf32> to vector<128xf32>
    %59 = vector.shape_cast %58 : vector<128xf32> to vector<1x128xf32>
    %cst_25 = arith.constant 1.250000e-01 : f32
    %60 = vector.broadcast %cst_25 : f32 to vector<1x128xf32>
    %61 = arith.mulf %56, %60 : vector<1x128xf32>
    %cst_26 = arith.constant 1.250000e-01 : f32
    %62 = vector.broadcast %cst_26 : f32 to vector<1x128xf32>
    %63 = arith.mulf %59, %62 : vector<1x128xf32>
    %64 = arith.mulf %61, %61 : vector<1x128xf32>
    %65 = arith.subf %63, %64 : vector<1x128xf32>
    %cst_27 = arith.constant 9.99999974E-6 : f32
    %66 = vector.broadcast %cst_27 : f32 to vector<1x128xf32>
    %67 = arith.addf %65, %66 : vector<1x128xf32>
    %68 = math.rsqrt %67 : vector<1x128xf32>
    %69 = arith.mulf %4, %68 : vector<1x128xf32>
    %70 = vector.broadcast %69 : vector<1x128xf32> to vector<8x128xf32>
    %71 = arith.mulf %54, %70 : vector<8x128xf32>
    %72 = arith.mulf %61, %69 : vector<1x128xf32>
    %73 = arith.subf %5, %72 : vector<1x128xf32>
    %74 = vector.broadcast %73 : vector<1x128xf32> to vector<8x128xf32>
    %75 = arith.addf %71, %74 : vector<8x128xf32>
    %cst_28 = arith.constant 0.000000e+00 : f32
    %76 = vector.broadcast %cst_28 : f32 to vector<8x128xf32>
    %77 = arith.maximumf %75, %76 : vector<8x128xf32>
    %c0_29 = arith.constant 0 : index
    %c0_30 = arith.constant 0 : index
    %78 = vector.load %arg3[%c0_29, %c0_30] : memref<128x128xf32, #tpu.memory_space<vmem>>, vector<128x128xf32>
    %cst_31 = arith.constant dense<0.000000e+00> : vector<8x128xf32>
    %79 = tpu.matmul %77, %78, %cst_31 {dimension_numbers = #tpu.dot_dimension_numbers<[1], [0], [0], [1], [0, 0, 1, 1], [], []>} : vector<8x128xf32>, vector<128x128xf32>, vector<8x128xf32> -> vector<8x128xf32>
    %80 = vector.broadcast %3 : vector<1x128xf32> to vector<8x128xf32>
    %81 = arith.addf %79, %80 : vector<8x128xf32>
    %c0_32 = arith.constant 0 : index
    %c0_33 = arith.constant 0 : index
    %82 = vector.load %arg5[%c0_32, %c0_33] : memref<8x128xf32, #tpu.memory_space<vmem>>, vector<8x128xf32>
    tpu.vector_store %arg5[%c0_32, %c0_33], %81 {strides = array<i32>} : memref<8x128xf32, #tpu.memory_space<vmem>>, vector<8x128xf32>,
    return
  }
}

</mosaic_0001>

<llo_original>
// kernel: _actor_forward_impl.1
$region0: #{_actor_forward_impl.1}
  #allocation0 [shape = 'u32[]', space=smem, size = 0x4, offset = 0x4, fixed_abs, tag = 'smem constant byte address 0x4 - core index']
  #allocation1 [shape = 'u32[144,128]{1,0:T(1,128)}', space=vmem, size = 0x12000, scoped, tag = 'internal scratch']
  %s0 = inlined_call_operand.hbm [shape: f32[8,16], index: 0, kind: input, shape index: {}]
  %s1 = inlined_call_operand.hbm [shape: f32[16,128], index: 1, kind: input, shape index: {}]
  %s2 = inlined_call_operand.hbm [shape: f32[128,128], index: 2, kind: input, shape index: {}]
  %s3 = inlined_call_operand.hbm [shape: f32[128,128], index: 3, kind: input, shape index: {}]
  %s4 = inlined_call_operand.hbm [shape: f32[8,128], index: 4, kind: input, shape index: {}]
  %s5 = inlined_call_operand.vmem [shape: f32[8,128], index: 5, kind: output, shape index: {}]
  %s6 = sld [smem:[#allocation0]]
  $region50: #{_actor_forward_impl.1} parent=0
    _
  %s8 = ssub.s32 1, %s6
  %s9 = scalar_select 0, %s8, %s6
  $region1: #{_actor_forward_impl.1} parent=0
    #allocation2 [shape = 'u8[4096]{0}', space=vmem, size = 0x1000, scoped, tag = 'input window, operand 0, single buffered']
    #allocation3 [shape = 's32[1]{0}', space=sflag, size = 0x4, scoped, tag = 'scoped memory for _actor_forward_impl.1']
    #allocation4 [shape = 'u8[8192]{0}', space=vmem, size = 0x2000, scoped, tag = 'input window, operand 1, single buffered']
    #allocation5 [shape = 's32[1]{0}', space=sflag, size = 0x4, scoped, tag = 'scoped memory for _actor_forward_impl.1']
    #allocation6 [shape = 'u8[65536]{0}', space=vmem, size = 0x10000, scoped, tag = 'input window, operand 2, single buffered']
    #allocation7 [shape = 'u8[65536]{0}', space=vmem, size = 0x10000, scoped, tag = 'input window, operand 3, single buffered']
    #allocation8 [shape = 's32[1]{0}', space=sflag, size = 0x4, scoped, tag = 'scoped memory for _actor_forward_impl.1']
    #allocation9 [shape = 'u8[4096]{0}', space=vmem, size = 0x1000, scoped, tag = 'input window, operand 4, single buffered']
    %10 = vsyncpa [#allocation3], 0
    %11 = vsyncpa [#allocation5], 0
    %12 = vsyncpa [#allocation8], 0
    // Predicated region
    $region2: #{_actor_forward_impl.1} parent=1 // pred_check
      _
    $region3: #{_actor_forward_impl.1} parent=1 // pred_check_branch
      %14 = sbr.rel (0) target = $region5
    $region4: #{_actor_forward_impl.1} parent=1 // pred_region
      %s16 = ssub.s32 128, 128
      %17 = vsyncadd [#allocation3], %s16
      %s19 = sshll.u32 [#allocation2], 4
      %s20 = int_to_ptr.vmem [resolvable:$true] %s19
      %22 = dma.hbm_to_vmem [thread:$0]  %s0, 128, %s20, [#allocation3]
    $region5: #{_actor_forward_impl.1} parent=1 // pred_fallthru
      _
    // Predicated region
    $region6: #{_actor_forward_impl.1} parent=1 // pred_check
      _
    $region7: #{_actor_forward_impl.1} parent=1 // pred_check_branch
      %24 = sbr.rel (0) target = $region9
    $region8: #{_actor_forward_impl.1} parent=1 // pred_region
      %s26 = ssub.s32 256, 256
      %27 = vsyncadd [#allocation5], %s26
      %s28 = sshll.u32 [#allocation4], 4
      %s29 = int_to_ptr.vmem [resolvable:$true] %s28
      %34 = dma.hbm_to_vmem [thread:$0]  %s1, 256, %s29, [#allocation5], 128, 128, 8
    $region9: #{_actor_forward_impl.1} parent=1 // pred_fallthru
      _
    // Predicated region
    $region10: #{_actor_forward_impl.1} parent=1 // pred_check
      _
    $region11: #{_actor_forward_impl.1} parent=1 // pred_check_branch
      %36 = sbr.rel (0) target = $region13
    $region12: #{_actor_forward_impl.1} parent=1 // pred_region
      %s38 = ssub.s32 2048, 2048
      %39 = vsyncadd [#allocation5], %s38
      %s40 = sshll.u32 [#allocation6], 4
      %s41 = int_to_ptr.vmem [resolvable:$true] %s40
      %46 = dma.hbm_to_vmem [thread:$0]  %s2, 2048, %s41, [#allocation5], 128, 128, 8
    $region13: #{_actor_forward_impl.1} parent=1 // pred_fallthru
      _
    // Predicated region
    $region14: #{_actor_forward_impl.1} parent=1 // pred_check
      _
    $region15: #{_actor_forward_impl.1} parent=1 // pred_check_branch
      %48 = sbr.rel (0) target = $region17
    $region16: #{_actor_forward_impl.1} parent=1 // pred_region
      %s50 = ssub.s32 2048, 2048
      %51 = vsyncadd [#allocation8], %s50
      %s52 = sshll.u32 [#allocation7], 4
      %s53 = int_to_ptr.vmem [resolvable:$true] %s52
      %58 = dma.hbm_to_vmem [thread:$0]  %s3, 2048, %s53, [#allocation8], 128, 128, 8
    $region17: #{_actor_forward_impl.1} parent=1 // pred_fallthru
      _
    // Predicated region
    $region18: #{_actor_forward_impl.1} parent=1 // pred_check
      _
    $region19: #{_actor_forward_impl.1} parent=1 // pred_check_branch
      %60 = sbr.rel (0) target = $region21
    $region20: #{_actor_forward_impl.1} parent=1 // pred_region
      %s62 = ssub.s32 128, 128
      %63 = vsyncadd [#allocation8], %s62
      %s65 = sshll.u32 [#allocation9], 4
      %s66 = int_to_ptr.vmem [resolvable:$true] %s65
      %68 = dma.hbm_to_vmem [thread:$0]  %s4, 128, %s66, [#allocation8]
    $region21: #{_actor_forward_impl.1} parent=1 // pred_fallthru
      _
    // Predicated region
    $region22: #{_actor_forward_impl.1} parent=1 // pred_check
      _
    $region23: #{_actor_forward_impl.1} parent=1 // pred_check_branch
      %70 = sbr.rel (0) target = $region25
    $region24: #{_actor_forward_impl.1} parent=1 // pred_region
      %71 = dma.done [#allocation3], 128
    $region25: #{_actor_forward_impl.1} parent=1 // pred_fallthru
      _
    // Predicated region
    $region26: #{_actor_forward_impl.1} parent=1 // pred_check
      _
    $region27: #{_actor_forward_impl.1} parent=1 // pred_check_branch
      %73 = sbr.rel (0) target = $region29
    $region28: #{_actor_forward_impl.1} parent=1 // pred_region
      %74 = dma.done [#allocation5], 256
    $region29: #{_actor_forward_impl.1} parent=1 // pred_fallthru
      _
    // Predicated region
    $region30: #{_actor_forward_impl.1} parent=1 // pred_check
      _
    $region31: #{_actor_forward_impl.1} parent=1 // pred_check_branch
      %76 = sbr.rel (0) target = $region33
    $region32: #{_actor_forward_impl.1} parent=1 // pred_region
      %77 = dma.done [#allocation5], 2048
    $region33: #{_actor_forward_impl.1} parent=1 // pred_fallthru
      _
    // Predicated region
    $region34: #{_actor_forward_impl.1} parent=1 // pred_check
      _
    $region35: #{_actor_forward_impl.1} parent=1 // pred_check_branch
      %79 = sbr.rel (0) target = $region37
    $region36: #{_actor_forward_impl.1} parent=1 // pred_region
      %80 = dma.done [#allocation8], 2048
    $region37: #{_actor_forward_impl.1} parent=1 // pred_fallthru
      _
    // Predicated region
    $region38: #{_actor_forward_impl.1} parent=1 // pred_check
      _
    $region39: #{_actor_forward_impl.1} parent=1 // pred_check_branch
      %82 = sbr.rel (0) target = $region41
    $region40: #{_actor_forward_impl.1} parent=1 // pred_region
      %83 = dma.done [#allocation8], 128
    $region41: #{_actor_forward_impl.1} parent=1 // pred_fallthru
      _
    %v84 = vld [vmem:[#allocation2] sm:$0xff]
    %v85 = vld [vmem:[#allocation9] sm:$0x1]
    %v86 = vld [vmem:[#allocation9 + $0x1] sm:$0x1]
    %v87 = vld [vmem:[#allocation9 + $0x2] sm:$0x1]
    %v88 = vld [vmem:[#allocation9 + $0x3] sm:$0x1]
    %v89 = vld [vmem:[#allocation9 + $0x4] sm:$0x1]
    %vm90 = vcmask 130048
    %v91 = vsel %vm90, %v84, 0.0
    %v92 = vrot.slane %v91, 4
    %v93 = vadd.f32 %v91, %v92
    %v94 = vrot.slane %v93, 2
    %v95 = vadd.f32 %v93, %v94
    %v96 = vrot.slane %v95, 1
    %v97 = vadd.f32 %v95, %v96
    %v98 = vmul.f32 %v84, %v84
    %v99 = vsel %vm90, %v98, 0.0
    %v100 = vrot.slane %v99, 4
    %v101 = vadd.f32 %v99, %v100
    %v102 = vrot.slane %v101, 2
    %v103 = vadd.f32 %v101, %v102
    %v104 = vrot.slane %v103, 1
    %v105 = vadd.f32 %v103, %v104
    %v106 = vmul.f32 %v97, 0.125
    %v107 = vmul.f32 %v105, 0.125
    %v108 = vmul.f32 %v106, %v106
    %v109 = vsub.f32 %v107, %v108
    %v110 = vadd.f32 %v109, 1e-05
    %v111 = vrsqrt.pop %v110
    %v112 = vsub.f32 %v84, %v106
    %v113 = vmul.f32 %v112, %v111
    %v114 = vld [vmem:[#allocation4] sm:$0xff]
    %v115 = vld [vmem:[#allocation4 + $0x8] sm:$0xff]
    %v116 = vlaneseq
    %v117 = vshrl.u32 %v116, 7
    %v118 = vsub.s32 0, %v117
    %v119 = vrot.slane %v85, %v118
    %v121 = vsel %vm90, %v113, 0
    %123 = vmatprep.subr.mxu0 0.0
    %124 = vmatpush1.msra.mxu0 0.0
    %125 = vmatprep.subr.mxu0 0.0
    %126 = vmatpush1.msra.mxu0 0.0
    %127 = vmatprep.subr.mxu0 0.0
    %128 = vmatpush1.msra.mxu0 0.0
    %129 = vmatprep.subr.mxu0 0.0
    %130 = vmatpush1.msra.mxu0 0.0
    %131 = vmatprep.subr.mxu0 0.0
    %132 = vmatpush1.msra.mxu0 0.0
    %133 = vmatprep.subr.mxu0 0.0
    %134 = vmatpush1.msra.mxu0 0.0
    %135 = vmatprep.subr.mxu0 0.0
    %136 = vmatpush1.msra.mxu0 0.0
    %137 = vmatprep.subr.mxu0 0.0
    %138 = vmatpush1.msra.mxu0 0.0
    %139 = vmatprep.subr.mxu0 0.0
    %140 = vmatpush1.msra.mxu0 0.0
    %141 = vmatprep.subr.mxu0 0.0
    %142 = vmatpush1.msra.mxu0 0.0
    %143 = vmatprep.subr.mxu0 0.0
    %144 = vmatpush1.msra.mxu0 0.0
    %145 = vmatprep.subr.mxu0 0.0
    %146 = vmatpush1.msra.mxu0 0.0
    %147 = vmatprep.subr.mxu0 0.0
    %148 = vmatpush1.msra.mxu0 0.0
    %149 = vmatprep.subr.mxu0 0.0
    %150 = vmatpush1.msra.mxu0 0.0
    %151 = vmatprep.subr.mxu0 0.0
    %152 = vmatpush1.msra.mxu0 %v115
    %153 = vmatprep.subr.mxu0 0.0
    %154 = vmatpush1.msra.mxu0 %v114
    %155 = vmatprep.subr.mxu0 0.0
    %156 = vmatpush2.msra.mxu0 0.0
    %157 = vmatprep.subr.mxu0 0.0
    %158 = vmatpush2.msra.mxu0 0.0
    %159 = vmatprep.subr.mxu0 0.0
    %160 = vmatpush2.msra.mxu0 0.0
    %161 = vmatprep.subr.mxu0 0.0
    %162 = vmatpush2.msra.mxu0 0.0
    %163 = vmatprep.subr.mxu0 0.0
    %164 = vmatpush2.msra.mxu0 0.0
    %165 = vmatprep.subr.mxu0 0.0
    %166 = vmatpush2.msra.mxu0 0.0
    %167 = vmatprep.subr.mxu0 0.0
    %168 = vmatpush2.msra.mxu0 0.0
    %169 = vmatprep.subr.mxu0 0.0
    %170 = vmatpush2.msra.mxu0 0.0
    %171 = vmatprep.subr.mxu0 0.0
    %172 = vmatpush2.msra.mxu0 0.0
    %173 = vmatprep.subr.mxu0 0.0
    %174 = vmatpush2.msra.mxu0 0.0
    %175 = vmatprep.subr.mxu0 0.0
    %176 = vmatpush2.msra.mxu0 0.0
    %177 = vmatprep.subr.mxu0 0.0
    %178 = vmatpush2.msra.mxu0 0.0
    %179 = vmatprep.subr.mxu0 0.0
    %180 = vmatpush2.msra.mxu0 0.0
    %181 = vmatprep.subr.mxu0 0.0
    %182 = vmatpush2.msra.mxu0 0.0
    %183 = vmatprep.subr.mxu0 0.0
    %184 = vmatpush2.msra.mxu0 0.0
    %185 = vmatprep.subr.mxu0 0.0
    %186 = vmatpush2.msra.mxu0 0.0
    %187 = vmatprep.mubr.f32.mxu0 0.0
    %188 = vmatmul.mubr.f32.gmra.mxu0 %v121
    %v189 = vpop.f32.mrf.mxu0
    %v190 = vadd.f32 %v119, %v189
    %v191 = vpop.f32.mrf.mxu0
    %192 = vdwg.mxu0
    %v193 = vrot.slane %v190, 4
    %v194 = vadd.f32 %v190, %v193
    %v195 = vrot.slane %v194, 2
    %v196 = vadd.f32 %v194, %v195
    %v197 = vrot.slane %v196, 1
    %v198 = vadd.f32 %v196, %v197
    %v199 = vmul.f32 %v190, %v190
    %v200 = vrot.slane %v199, 4
    %v201 = vadd.f32 %v199, %v200
    %v202 = vrot.slane %v201, 2
    %v203 = vadd.f32 %v201, %v202
    %v204 = vrot.slane %v203, 1
    %v205 = vadd.f32 %v203, %v204
    %v206 = vmul.f32 %v198, 0.125
    %v207 = vmul.f32 %v205, 0.125
    %v208 = vmul.f32 %v206, %v206
    %v209 = vsub.f32 %v207, %v208
    %v210 = vadd.f32 %v209, 1e-05
    %v211 = vrsqrt.pop %v210
    %v212 = vmul.f32 %v88, %v211
    %v213 = vlaneseq
    %v214 = vshrl.u32 %v213, 7
    %v215 = vsub.s32 0, %v214
    %v216 = vrot.slane %v212, %v215
    %v217 = vmul.f32 %v190, %v216
    %v218 = vmul.f32 %v206, %v212
    %v219 = vsub.f32 %v89, %v218
    %v220 = vlaneseq
    %v221 = vshrl.u32 %v220, 7
    %v222 = vsub.s32 0, %v221
    %v223 = vrot.slane %v219, %v222
    %v224 = vadd.f32 %v217, %v223
    %v225 = vmax.f32 %v224, 0.0
    %v226 = vld [vmem:[#allocation6] sm:$0xff]
    %v227 = vld [vmem:[#allocation6 + $0x8] sm:$0xff]
    %v228 = vld [vmem:[#allocation6 + $0x10] sm:$0xff]
    %v229 = vld [vmem:[#allocation6 + $0x18] sm:$0xff]
    %v230 = vld [vmem:[#allocation6 + $0x20] sm:$0xff]
    %v231 = vld [vmem:[#allocation6 + $0x28] sm:$0xff]
    %v232 = vld [vmem:[#allocation6 + $0x30] sm:$0xff]
    %v233 = vld [vmem:[#allocation6 + $0x38] sm:$0xff]
    %v234 = vld [vmem:[#allocation6 + $0x40] sm:$0xff]
    %v235 = vld [vmem:[#allocation6 + $0x48] sm:$0xff]
    %v236 = vld [vmem:[#allocation6 + $0x50] sm:$0xff]
    %v237 = vld [vmem:[#allocation6 + $0x58] sm:$0xff]
    %v238 = vld [vmem:[#allocation6 + $0x60] sm:$0xff]
    %v239 = vld [vmem:[#allocation6 + $0x68] sm:$0xff]
    %v240 = vld [vmem:[#allocation6 + $0x70] sm:$0xff]
    %v241 = vld [vmem:[#allocation6 + $0x78] sm:$0xff]
    %v242 = vlaneseq
    %v243 = vshrl.u32 %v242, 7
    %v244 = vsub.s32 0, %v243
    %v245 = vrot.slane %v86, %v244
    %246 = vmatprep.subr.mxu0 0.0
    %247 = vmatpush1.msra.mxu0 %v241
    %248 = vmatprep.subr.mxu0 0.0
    %249 = vmatpush1.msra.mxu0 %v240
    %250 = vmatprep.subr.mxu0 0.0
    %251 = vmatpush1.msra.mxu0 %v239
    %252 = vmatprep.subr.mxu0 0.0
    %253 = vmatpush1.msra.mxu0 %v238
    %254 = vmatprep.subr.mxu0 0.0
    %255 = vmatpush1.msra.mxu0 %v237
    %256 = vmatprep.subr.mxu0 0.0
    %257 = vmatpush1.msra.mxu0 %v236
    %258 = vmatprep.subr.mxu0 0.0
    %259 = vmatpush1.msra.mxu0 %v235
    %260 = vmatprep.subr.mxu0 0.0
    %261 = vmatpush1.msra.mxu0 %v234
    %262 = vmatprep.subr.mxu0 0.0
    %263 = vmatpush1.msra.mxu0 %v233
    %264 = vmatprep.subr.mxu0 0.0
    %265 = vmatpush1.msra.mxu0 %v232
    %266 = vmatprep.subr.mxu0 0.0
    %267 = vmatpush1.msra.mxu0 %v231
    %268 = vmatprep.subr.mxu0 0.0
    %269 = vmatpush1.msra.mxu0 %v230
    %270 = vmatprep.subr.mxu0 0.0
    %271 = vmatpush1.msra.mxu0 %v229
    %272 = vmatprep.subr.mxu0 0.0
    %273 = vmatpush1.msra.mxu0 %v228
    %274 = vmatprep.subr.mxu0 0.0
    %275 = vmatpush1.msra.mxu0 %v227
    %276 = vmatprep.subr.mxu0 0.0
    %277 = vmatpush1.msra.mxu0 %v226
    %278 = vmatprep.subr.mxu0 0.0
    %279 = vmatpush2.msra.mxu0 0.0
    %280 = vmatprep.subr.mxu0 0.0
    %281 = vmatpush2.msra.mxu0 0.0
    %282 = vmatprep.subr.mxu0 0.0
    %283 = vmatpush2.msra.mxu0 0.0
    %284 = vmatprep.subr.mxu0 0.0
    %285 = vmatpush2.msra.mxu0 0.0
    %286 = vmatprep.subr.mxu0 0.0
    %287 = vmatpush2.msra.mxu0 0.0
    %288 = vmatprep.subr.mxu0 0.0
    %289 = vmatpush2.msra.mxu0 0.0
    %290 = vmatprep.subr.mxu0 0.0
    %291 = vmatpush2.msra.mxu0 0.0
    %292 = vmatprep.subr.mxu0 0.0
    %293 = vmatpush2.msra.mxu0 0.0
    %294 = vmatprep.subr.mxu0 0.0
    %295 = vmatpush2.msra.mxu0 0.0
    %296 = vmatprep.subr.mxu0 0.0
    %297 = vmatpush2.msra.mxu0 0.0
    %298 = vmatprep.subr.mxu0 0.0
    %299 = vmatpush2.msra.mxu0 0.0
    %300 = vmatprep.subr.mxu0 0.0
    %301 = vmatpush2.msra.mxu0 0.0
    %302 = vmatprep.subr.mxu0 0.0
    %303 = vmatpush2.msra.mxu0 0.0
    %304 = vmatprep.subr.mxu0 0.0
    %305 = vmatpush2.msra.mxu0 0.0
    %306 = vmatprep.subr.mxu0 0.0
    %307 = vmatpush2.msra.mxu0 0.0
    %308 = vmatprep.subr.mxu0 0.0
    %309 = vmatpush2.msra.mxu0 0.0
    %310 = vmatprep.mubr.f32.mxu0 0.0
    %311 = vmatmul.mubr.f32.gmra.mxu0 %v225
    %v312 = vpop.f32.mrf.mxu0
    %v313 = vadd.f32 %v245, %v312
    %v314 = vpop.f32.mrf.mxu0
    %315 = vdwg.mxu0
    %v316 = vrot.slane %v313, 4
    %v317 = vadd.f32 %v313, %v316
    %v318 = vrot.slane %v317, 2
    %v319 = vadd.f32 %v317, %v318
    %v320 = vrot.slane %v319, 1
    %v321 = vadd.f32 %v319, %v320
    %v322 = vmul.f32 %v313, %v313
    %v323 = vrot.slane %v322, 4
    %v324 = vadd.f32 %v322, %v323
    %v325 = vrot.slane %v324, 2
    %v326 = vadd.f32 %v324, %v325
    %v327 = vrot.slane %v326, 1
    %v328 = vadd.f32 %v326, %v327
    %v329 = vmul.f32 %v321, 0.125
    %v330 = vmul.f32 %v328, 0.125
    %v331 = vmul.f32 %v329, %v329
    %v332 = vsub.f32 %v330, %v331
    %v333 = vadd.f32 %v332, 1e-05
    %v334 = vrsqrt.pop %v333
    %v335 = vmul.f32 %v88, %v334
    %v336 = vlaneseq
    %v337 = vshrl.u32 %v336, 7
    %v338 = vsub.s32 0, %v337
    %v339 = vrot.slane %v335, %v338
    %v340 = vmul.f32 %v313, %v339
    %v341 = vmul.f32 %v329, %v335
    %v342 = vsub.f32 %v89, %v341
    %v343 = vlaneseq
    %v344 = vshrl.u32 %v343, 7
    %v345 = vsub.s32 0, %v344
    %v346 = vrot.slane %v342, %v345
    %v347 = vadd.f32 %v340, %v346
    %v348 = vmax.f32 %v347, 0.0
    %v349 = vld [vmem:[#allocation7] sm:$0xff]
    %v350 = vld [vmem:[#allocation7 + $0x8] sm:$0xff]
    %v351 = vld [vmem:[#allocation7 + $0x10] sm:$0xff]
    %v352 = vld [vmem:[#allocation7 + $0x18] sm:$0xff]
    %v353 = vld [vmem:[#allocation7 + $0x20] sm:$0xff]
    %v354 = vld [vmem:[#allocation7 + $0x28] sm:$0xff]
    %v355 = vld [vmem:[#allocation7 + $0x30] sm:$0xff]
    %v356 = vld [vmem:[#allocation7 + $0x38] sm:$0xff]
    %v357 = vld [vmem:[#allocation7 + $0x40] sm:$0xff]
    %v358 = vld [vmem:[#allocation7 + $0x48] sm:$0xff]
    %v359 = vld [vmem:[#allocation7 + $0x50] sm:$0xff]
    %v360 = vld [vmem:[#allocation7 + $0x58] sm:$0xff]
    %v361 = vld [vmem:[#allocation7 + $0x60] sm:$0xff]
    %v362 = vld [vmem:[#allocation7 + $0x68] sm:$0xff]
    %v363 = vld [vmem:[#allocation7 + $0x70] sm:$0xff]
    %v364 = vld [vmem:[#allocation7 + $0x78] sm:$0xff]
    %v365 = vlaneseq
    %v366 = vshrl.u32 %v365, 7
    %v367 = vsub.s32 0, %v366
    %v368 = vrot.slane %v87, %v367
    %369 = vmatprep.subr.mxu0 0.0
    %370 = vmatpush1.msra.mxu0 %v364
    %371 = vmatprep.subr.mxu0 0.0
    %372 = vmatpush1.msra.mxu0 %v363
    %373 = vmatprep.subr.mxu0 0.0
    %374 = vmatpush1.msra.mxu0 %v362
    %375 = vmatprep.subr.mxu0 0.0
    %376 = vmatpush1.msra.mxu0 %v361
    %377 = vmatprep.subr.mxu0 0.0
    %378 = vmatpush1.msra.mxu0 %v360
    %379 = vmatprep.subr.mxu0 0.0
    %380 = vmatpush1.msra.mxu0 %v359
    %381 = vmatprep.subr.mxu0 0.0
    %382 = vmatpush1.msra.mxu0 %v358
    %383 = vmatprep.subr.mxu0 0.0
    %384 = vmatpush1.msra.mxu0 %v357
    %385 = vmatprep.subr.mxu0 0.0
    %386 = vmatpush1.msra.mxu0 %v356
    %387 = vmatprep.subr.mxu0 0.0
    %388 = vmatpush1.msra.mxu0 %v355
    %389 = vmatprep.subr.mxu0 0.0
    %390 = vmatpush1.msra.mxu0 %v354
    %391 = vmatprep.subr.mxu0 0.0
    %392 = vmatpush1.msra.mxu0 %v353
    %393 = vmatprep.subr.mxu0 0.0
    %394 = vmatpush1.msra.mxu0 %v352
    %395 = vmatprep.subr.mxu0 0.0
    %396 = vmatpush1.msra.mxu0 %v351
    %397 = vmatprep.subr.mxu0 0.0
    %398 = vmatpush1.msra.mxu0 %v350
    %399 = vmatprep.subr.mxu0 0.0
    %400 = vmatpush1.msra.mxu0 %v349
    %401 = vmatprep.subr.mxu0 0.0
    %402 = vmatpush2.msra.mxu0 0.0
    %403 = vmatprep.subr.mxu0 0.0
    %404 = vmatpush2.msra.mxu0 0.0
    %405 = vmatprep.subr.mxu0 0.0
    %406 = vmatpush2.msra.mxu0 0.0
    %407 = vmatprep.subr.mxu0 0.0
    %408 = vmatpush2.msra.mxu0 0.0
    %409 = vmatprep.subr.mxu0 0.0
    %410 = vmatpush2.msra.mxu0 0.0
    %411 = vmatprep.subr.mxu0 0.0
    %412 = vmatpush2.msra.mxu0 0.0
    %413 = vmatprep.subr.mxu0 0.0
    %414 = vmatpush2.msra.mxu0 0.0
    %415 = vmatprep.subr.mxu0 0.0
    %416 = vmatpush2.msra.mxu0 0.0
    %417 = vmatprep.subr.mxu0 0.0
    %418 = vmatpush2.msra.mxu0 0.0
    %419 = vmatprep.subr.mxu0 0.0
    %420 = vmatpush2.msra.mxu0 0.0
    %421 = vmatprep.subr.mxu0 0.0
    %422 = vmatpush2.msra.mxu0 0.0
    %423 = vmatprep.subr.mxu0 0.0
    %424 = vmatpush2.msra.mxu0 0.0
    %425 = vmatprep.subr.mxu0 0.0
    %426 = vmatpush2.msra.mxu0 0.0
    %427 = vmatprep.subr.mxu0 0.0
    %428 = vmatpush2.msra.mxu0 0.0
    %429 = vmatprep.subr.mxu0 0.0
    %430 = vmatpush2.msra.mxu0 0.0
    %431 = vmatprep.subr.mxu0 0.0
    %432 = vmatpush2.msra.mxu0 0.0
    %433 = vmatprep.mubr.f32.mxu0 0.0
    %434 = vmatmul.mubr.f32.gmra.mxu0 %v348
    %v435 = vpop.f32.mrf.mxu0
    %v436 = vadd.f32 %v368, %v435
    %v437 = vpop.f32.mrf.mxu0
    %438 = vdwg.mxu0
    %439 = vst [vmem:[%s5] sm:$0xff] %v436
    // Predicated region
    $region42: #{_actor_forward_impl.1} parent=1 // pred_check
      _
    $region43: #{_actor_forward_impl.1} parent=1 // pred_check_branch
      %441 = sbr.rel (0) target = $region45
    $region44: #{_actor_forward_impl.1} parent=1 // pred_region
      _
    $region45: #{_actor_forward_impl.1} parent=1 // pred_fallthru
      _
    // Predicated region
    $region46: #{_actor_forward_impl.1} parent=1 // pred_check
      _
    $region47: #{_actor_forward_impl.1} parent=1 // pred_check_branch
      %443 = sbr.rel (0) target = $region49
    $region48: #{_actor_forward_impl.1} parent=1 // pred_region
      _
    $region49: #{_actor_forward_impl.1} parent=1 // pred_fallthru
      _
    %444 = vsyncpa [#allocation3], 1
    %445 = vsyncpa [#allocation5], 1
    %446 = vsyncpa [#allocation8], 1

</llo_original>
